<compile_context>
chip_gen: v7x
topology: tpu7x:2x2x1
jax: 0.10.0
libtpu: 0.0.40
codegen_flags: <defaults>
</compile_context>

<pallas_src>
import jax
import jax.numpy as jnp
from jax.experimental import pallas as pl
from jax.experimental.pallas import tpu as pltpu

IN_FEATS = 6
HIDDEN_FEATS = 16
OUT_FEATS = 1

# A bf16 (N, 16) feature block lane-pads to 128 lanes in VMEM: ~256 B per row.
_LANE_ROW_BYTES = 128 * 2


def _round_up(x: int, m: int) -> int:
    return ((x + m - 1) // m) * m


def _vmem_limit_bytes() -> int:
    """Per-generation scoped-VMEM limit (~85% of physical per-core VMEM).

    v7x: 64 MiB/TC -> ~54 MiB; v5e/v6e: 128 MiB -> ~108 MiB.  Falls back to the
    v7x (smallest) figure if the hardware query is unavailable.
    """
    cap = 64 * 1024 * 1024
    try:
        queried = int(pltpu.get_tpu_info().vmem_capacity_bytes)
        if queried > 0:
            cap = queried
    except Exception:
        pass
    return int(cap * 0.85)


def build_plan(n: int) -> dict:
    """Choose fused vs. row-tiled execution and a VMEM-budget-derived row tile."""
    vmem_limit = _vmem_limit_bytes()
    budget = int(vmem_limit * 0.75)  # headroom for outputs / Mosaic internal scratch
    n_pad = _round_up(max(n, 8), 128)

    # Fused single-call path: full bf16 A_hat resident in VMEM (one HBM read for
    # both layers) plus (N, 16)-ish temporaries.
    fused_bytes = 2 * n_pad * n_pad + 6 * n_pad * _LANE_ROW_BYTES
    if fused_bytes <= budget:
        return {"mode": "fused", "tm": n_pad, "n_pad": n_pad, "vmem_limit": vmem_limit}

    # Row-tiled two-pass path: double-buffered (tm, N) bf16 A strip + single-buffered
    # resident projected features.  Pick the largest tm (multiple of 128, <=1024,
    # beyond which per-step overhead amortization has diminishing returns) that fits.
    avail = budget - 2 * n_pad * _LANE_ROW_BYTES
    tm = avail // (2 * 2 * n_pad)  # 2 buffers x bf16 strip rows
    tm = max(128, min((tm // 128) * 128, 1024, n_pad))
    # TODO(synk): for graphs where even a (128, N) strip overflows the budget
    # (N beyond ~100k on v7x), add a column/contraction grid axis with an f32 VMEM
    # accumulator (init at k==0, relu+store at k==last) instead of full-width strips.
    n_pad = _round_up(n, tm)
    return {"mode": "tiled", "tm": tm, "n_pad": n_pad, "vmem_limit": vmem_limit}


def prepare_graph(a_hat: jax.Array, plan: dict) -> jax.Array:
    """Pad A_hat to (n_pad, n_pad) and cast to bf16.  Call ONCE per graph — the
    f32->bf16 cast reads 4*N^2 and writes 2*N^2 bytes of HBM (~1.5x a kernel A
    read), so it must not sit on the per-forward path."""
    n = a_hat.shape[0]
    n_pad = plan["n_pad"]
    a_bf = a_hat.astype(jnp.bfloat16)
    if n_pad == n:
        return a_bf
    return jnp.zeros((n_pad, n_pad), jnp.bfloat16).at[:n, :n].set(a_bf)


def _resident(shape):
    """Constant-index (VMEM-resident) block.  It is DMA'd exactly once, so the
    default second pipeline buffer would only waste VMEM -> single-buffer it."""
    idx = lambda i: (0,) * len(shape)
    try:
        return pl.BlockSpec(shape, idx, pipeline_mode=pl.Buffered(1))
    except Exception:  # older jax without pipeline_mode / Buffered
        return pl.BlockSpec(shape, idx)


# ----------------------------- kernels -------------------------------------


def gnn_fused_kernel(a_ref, p1_ref, w2_ref, b1_ref, b2_ref, w3t_ref, b3_ref, o_ref):
    """Whole forward with A_hat VMEM-resident (read from HBM once).

    Layer 1: H1 = relu(A @ P1 + b1), P1 = H @ W1 pre-projected in the wrapper.
    Layer 2: H2 = relu(A @ H1 @ W2 + b2).
    Head   : out = W3 . H2 + b3, stored lane-dense as (1, N).
    """
    h1 = jnp.maximum(
        jnp.dot(a_ref[...], p1_ref[...], preferred_element_type=jnp.float32)
        + b1_ref[...],
        0.0,
    ).astype(jnp.bfloat16)
    agg = jnp.dot(a_ref[...], h1, preferred_element_type=jnp.float32)
    h2 = jnp.maximum(
        jnp.dot(agg, w2_ref[...], preferred_element_type=jnp.float32) + b2_ref[...],
        0.0,
    )
    o = jax.lax.dot_general(
        w3t_ref[...], h2, (((1,), (1,)), ((), ())),
        preferred_element_type=jnp.float32,
    )
    o_ref[...] = o + b3_ref[0, 0]


def graphconv_kernel(a_ref, p_ref, b_ref, o_ref):
    """One GraphConv row tile: relu(A_tile @ P + b), P = H @ W pre-projected."""
    z = jnp.dot(a_ref[...], p_ref[...], preferred_element_type=jnp.float32) + b_ref[...]
    o_ref[...] = jnp.maximum(z, 0.0).astype(o_ref.dtype)


def graphconv_head_kernel(a_ref, p_ref, b_ref, w3t_ref, b3_ref, o_ref):
    """GraphConv 2 row tile fused with the Linear head; lane-dense (1, TM) output."""
    z = jnp.dot(a_ref[...], p_ref[...], preferred_element_type=jnp.float32) + b_ref[...]
    h2 = jnp.maximum(z, 0.0)
    o = jax.lax.dot_general(
        w3t_ref[...], h2, (((1,), (1,)), ((), ())),
        preferred_element_type=jnp.float32,
    )
    o_ref[...] = o + b3_ref[0, 0]


# ----------------------------- forward -------------------------------------


def gnn_forward(a_prep, h, params, plan):
    """a_prep: (n_pad, n_pad) bf16 padded normalized adjacency (prepare_graph);
    h: (N, IN_FEATS) f32 node features.  Returns (N,) f32 (== linear(h).squeeze(1))."""
    n = h.shape[0]
    n_pad, tm = plan["n_pad"], plan["tm"]
    w1, b1, w2, b2, w3, b3 = params

    # Pre-project features: relu(A @ (H W1) + b1) == relu(A @ H @ W1 + b1).
    if n_pad == n:
        h_pad = h
    else:
        h_pad = jnp.zeros((n_pad, IN_FEATS), h.dtype).at[:n, :].set(h)
    p1 = jnp.dot(h_pad, w1).astype(jnp.bfloat16)                    # (n_pad, 16)

    w3t = w3.reshape(HIDDEN_FEATS, OUT_FEATS).T.astype(jnp.float32)  # (1, 16)
    b3_s = b3.reshape(1, 1).astype(jnp.float32)
    b1 = b1.reshape(1, HIDDEN_FEATS).astype(jnp.float32)
    b2 = b2.reshape(1, HIDDEN_FEATS).astype(jnp.float32)

    if plan["mode"] == "fused":
        vmem = pl.BlockSpec(memory_space=pltpu.MemorySpace.VMEM)
        out = pl.pallas_call(
            gnn_fused_kernel,
            out_shape=jax.ShapeDtypeStruct((1, n_pad), jnp.float32),
            in_specs=[vmem, vmem, vmem, vmem, vmem, vmem,
                      pl.BlockSpec(memory_space=pltpu.MemorySpace.SMEM)],
            out_specs=pl.BlockSpec(memory_space=pltpu.MemorySpace.VMEM),
            compiler_params=pltpu.CompilerParams(vmem_limit_bytes=plan["vmem_limit"]),
            cost_estimate=pl.CostEstimate(
                flops=4 * n_pad * n_pad * HIDDEN_FEATS,
                transcendentals=0,
                bytes_accessed=2 * n_pad * n_pad + 8 * n_pad * HIDDEN_FEATS,
            ),
        )(a_prep, p1, w2, b1, b2, w3t, b3_s)
        return out.reshape(n_pad)[:n]

    # ---- Row-tiled two-pass path (A_hat too large for VMEM residency) ----
    grid = (n_pad // tm,)
    cparams = pltpu.CompilerParams(
        dimension_semantics=("parallel",),   # independent row tiles
        vmem_limit_bytes=plan["vmem_limit"],
    )
    pass_cost = pl.CostEstimate(
        flops=2 * n_pad * n_pad * HIDDEN_FEATS,
        transcendentals=0,
        bytes_accessed=2 * n_pad * n_pad + 4 * n_pad * HIDDEN_FEATS,
    )

    # Pass 1: H1 = relu(A @ P1 + b1), row-tiled & double-buffered over A.
    h1 = pl.pallas_call(
        graphconv_kernel,
        out_shape=jax.ShapeDtypeStruct((n_pad, HIDDEN_FEATS), jnp.bfloat16),
        grid=grid,
        in_specs=[
            pl.BlockSpec((tm, n_pad), lambda i: (i, 0)),   # A strip (pipelined)
            _resident((n_pad, HIDDEN_FEATS)),              # P1
            _resident((1, HIDDEN_FEATS)),                  # b1
        ],
        out_specs=pl.BlockSpec((tm, HIDDEN_FEATS), lambda i: (i, 0)),
        compiler_params=cparams,
        cost_estimate=pass_cost,
    )(a_prep, p1, b1)

    # Tiny (N,16)@(16,16) projection between passes (XLA).
    p2 = jnp.dot(h1.astype(jnp.float32), w2).astype(jnp.bfloat16)

    # Pass 2: out = relu(A @ P2 + b2) @ W3 + b3, lane-dense (1, N).
    out = pl.pallas_call(
        graphconv_head_kernel,
        out_shape=jax.ShapeDtypeStruct((1, n_pad), jnp.float32),
        grid=grid,
        in_specs=[
            pl.BlockSpec((tm, n_pad), lambda i: (i, 0)),   # A strip (pipelined)
            _resident((n_pad, HIDDEN_FEATS)),              # P2
            _resident((1, HIDDEN_FEATS)),                  # b2
            _resident((1, HIDDEN_FEATS)),                  # W3^T
            pl.BlockSpec(memory_space=pltpu.MemorySpace.SMEM),   # b3 scalar
        ],
        out_specs=pl.BlockSpec((1, tm), lambda i: (0, i)),
        compiler_params=cparams,
        cost_estimate=pass_cost,
    )(a_prep, p2, b2, w3t, b3_s)

    return out.reshape(n_pad)[:n]


# ----------------------------- test harness --------------------------------


def make_params(key):
    """Deterministic parameter init (uniform, fan-in scaled, like torch defaults)."""
    ks = jax.random.split(key, 6)

    def lin(kw, kb, fan_in, fan_out):
        bound = 1.0 / jnp.sqrt(jnp.float32(fan_in))
        w = jax.random.uniform(kw, (fan_in, fan_out), jnp.float32, -bound, bound)
        b = jax.random.uniform(kb, (1, fan_out), jnp.float32, -bound, bound)
        return w, b

    w1, b1 = lin(ks[0], ks[1], IN_FEATS, HIDDEN_FEATS)
    w2, b2 = lin(ks[2], ks[3], HIDDEN_FEATS, HIDDEN_FEATS)
    w3, b3 = lin(ks[4], ks[5], HIDDEN_FEATS, OUT_FEATS)
    return (w1, b1, w2, b2, w3, b3)


def make_normalized_adjacency(key, n):
    """Random symmetric graph with self-loops -> A_hat = D^{-1/2} A D^{-1/2}."""
    m = jax.random.uniform(key, (n, n), jnp.float32)
    adj = (m + m.T > 1.0).astype(jnp.float32)
    adj = jnp.maximum(adj, jnp.eye(n, dtype=jnp.float32))
    deg = adj.sum(axis=1)
    d_inv_sqrt = 1.0 / jnp.sqrt(deg)
    return adj * d_inv_sqrt[:, None] * d_inv_sqrt[None, :]


def reference(a_hat, h, params, mode):
    """Pure-JAX reference mirroring the kernel's bf16 quantization points."""
    w1, b1, w2, b2, w3, b3 = params
    f32 = jnp.float32
    a_q = a_hat.astype(jnp.bfloat16).astype(f32)
    p1 = jnp.dot(h, w1).astype(jnp.bfloat16).astype(f32)
    h1 = jnp.maximum(a_q @ p1 + b1, 0.0).astype(jnp.bfloat16).astype(f32)
    if mode == "fused":
        h2 = jnp.maximum((a_q @ h1) @ w2 + b2, 0.0)
    else:
        p2 = jnp.dot(h1, w2).astype(jnp.bfloat16).astype(f32)
        h2 = jnp.maximum(a_q @ p2 + b2, 0.0)
    return (h2 @ w3 + b3).reshape(-1)


if __name__ == "__main__":
    key = jax.random.PRNGKey(0)
    k_g1, k_f1, k_g2, k_f2, k_param = jax.random.split(key, 5)
    params = make_params(k_param)

    # Case 1: small graph -> fused single-call path (A_hat VMEM-resident).
    N1 = 64
    a_hat1 = make_normalized_adjacency(k_g1, N1)
    h1_in = jax.random.normal(k_f1, (N1, IN_FEATS), dtype=jnp.float32)
    plan1 = build_plan(N1)
    assert plan1["mode"] == "fused"
    a_prep1 = prepare_graph(a_hat1, plan1)
    out1 = gnn_forward(a_prep1, h1_in, params, plan1)
    jax.block_until_ready(out1)
    ref1 = reference(a_hat1, h1_in, params, plan1["mode"])
    assert out1.shape == (N1,)
    assert jnp.allclose(out1, ref1, atol=2e-2, rtol=2e-2), (
        f"fused mismatch (max abs err {jnp.max(jnp.abs(out1 - ref1))})")

    # Case 2: exercise the row-tiled two-pass fallback (used when A_hat does not
    # fit VMEM) at a small, fast size by forcing the plan.
    N2 = 256
    a_hat2 = make_normalized_adjacency(k_g2, N2)
    h2_in = jax.random.normal(k_f2, (N2, IN_FEATS), dtype=jnp.float32)
    plan2 = {"mode": "tiled", "tm": 128, "n_pad": 256,
             "vmem_limit": _vmem_limit_bytes()}
    a_prep2 = prepare_graph(a_hat2, plan2)
    out2 = gnn_forward(a_prep2, h2_in, params, plan2)
    jax.block_until_ready(out2)
    ref2 = reference(a_hat2, h2_in, params, plan2["mode"])
    assert out2.shape == (N2,)
    assert jnp.allclose(out2, ref2, atol=2e-2, rtol=2e-2), (
        f"tiled mismatch (max abs err {jnp.max(jnp.abs(out2 - ref2))})")

    print("KERNEL_OK")
</pallas_src>

<mosaic_0001>
module attributes {stable_mosaic.version = 11 : i64} {
  func.func @gnn_fused_kernel(%arg0: memref<128x128xbf16, #tpu.memory_space<vmem>>, %arg1: memref<128x16xbf16, #tpu.memory_space<vmem>>, %arg2: memref<16x16xf32, #tpu.memory_space<vmem>>, %arg3: memref<1x16xf32, #tpu.memory_space<vmem>>, %arg4: memref<1x16xf32, #tpu.memory_space<vmem>>, %arg5: memref<1x16xf32, #tpu.memory_space<vmem>>, %arg6: memref<1x1xf32, #tpu.memory_space<smem>>, %arg7: memref<1x128xf32, #tpu.memory_space<vmem>>) attributes {dimension_semantics = [], scalar_prefetch = 0 : i64, scratch_operands = 0 : i64, tpu.core_type = #tpu.core_type<tc>} {
    %c0 = arith.constant 0 : index
    %c0_0 = arith.constant 0 : index
    %0 = vector.load %arg0[%c0, %c0_0] : memref<128x128xbf16, #tpu.memory_space<vmem>>, vector<128x128xbf16>
    %c0_1 = arith.constant 0 : index
    %c0_2 = arith.constant 0 : index
    %1 = vector.load %arg1[%c0_1, %c0_2] : memref<128x16xbf16, #tpu.memory_space<vmem>>, vector<128x16xbf16>
    %cst = arith.constant dense<0.000000e+00> : vector<128x16xf32>
    %2 = tpu.matmul %0, %1, %cst {dimension_numbers = #tpu.dot_dimension_numbers<[1], [0], [0], [1], [0, 0, 1, 1], [], []>} : vector<128x128xbf16>, vector<128x16xbf16>, vector<128x16xf32> -> vector<128x16xf32>
    %c0_3 = arith.constant 0 : index
    %c0_4 = arith.constant 0 : index
    %3 = vector.load %arg3[%c0_3, %c0_4] : memref<1x16xf32, #tpu.memory_space<vmem>>, vector<1x16xf32>
    %4 = vector.broadcast %3 : vector<1x16xf32> to vector<128x16xf32>
    %5 = arith.addf %2, %4 : vector<128x16xf32>
    %cst_5 = arith.constant 0.000000e+00 : f32
    %6 = vector.broadcast %cst_5 : f32 to vector<128x16xf32>
    %7 = arith.maximumf %5, %6 : vector<128x16xf32>
    %8 = arith.truncf %7 : vector<128x16xf32> to vector<128x16xbf16>
    %c0_6 = arith.constant 0 : index
    %c0_7 = arith.constant 0 : index
    %9 = vector.load %arg0[%c0_6, %c0_7] : memref<128x128xbf16, #tpu.memory_space<vmem>>, vector<128x128xbf16>
    %cst_8 = arith.constant dense<0.000000e+00> : vector<128x16xf32>
    %10 = tpu.matmul %9, %8, %cst_8 {dimension_numbers = #tpu.dot_dimension_numbers<[1], [0], [0], [1], [0, 0, 1, 1], [], []>} : vector<128x128xbf16>, vector<128x16xbf16>, vector<128x16xf32> -> vector<128x16xf32>
    %c0_9 = arith.constant 0 : index
    %c0_10 = arith.constant 0 : index
    %11 = vector.load %arg2[%c0_9, %c0_10] : memref<16x16xf32, #tpu.memory_space<vmem>>, vector<16x16xf32>
    %cst_11 = arith.constant dense<0.000000e+00> : vector<128x16xf32>
    %12 = tpu.matmul %10, %11, %cst_11 {dimension_numbers = #tpu.dot_dimension_numbers<[1], [0], [0], [1], [0, 0, 1, 1], [], []>} : vector<128x16xf32>, vector<16x16xf32>, vector<128x16xf32> -> vector<128x16xf32>
    %c0_12 = arith.constant 0 : index
    %c0_13 = arith.constant 0 : index
    %13 = vector.load %arg4[%c0_12, %c0_13] : memref<1x16xf32, #tpu.memory_space<vmem>>, vector<1x16xf32>
    %14 = vector.broadcast %13 : vector<1x16xf32> to vector<128x16xf32>
    %15 = arith.addf %12, %14 : vector<128x16xf32>
    %cst_14 = arith.constant 0.000000e+00 : f32
    %16 = vector.broadcast %cst_14 : f32 to vector<128x16xf32>
    %17 = arith.maximumf %15, %16 : vector<128x16xf32>
    %c0_15 = arith.constant 0 : index
    %c0_16 = arith.constant 0 : index
    %18 = vector.load %arg5[%c0_15, %c0_16] : memref<1x16xf32, #tpu.memory_space<vmem>>, vector<1x16xf32>
    %cst_17 = arith.constant dense<0.000000e+00> : vector<1x128xf32>
    %19 = tpu.matmul %18, %17, %cst_17 {dimension_numbers = #tpu.dot_dimension_numbers<[1], [1], [0], [0], [0, 0, 1, 0], [], []>} : vector<1x16xf32>, vector<128x16xf32>, vector<1x128xf32> -> vector<1x128xf32>
    %c0_18 = arith.constant 0 : index
    %c0_19 = arith.constant 0 : index
    %20 = memref.load %arg6[%c0_18, %c0_19] : memref<1x1xf32, #tpu.memory_space<smem>>
    %21 = vector.broadcast %20 : f32 to vector<1x128xf32>
    %22 = arith.addf %19, %21 : vector<1x128xf32>
    %c0_20 = arith.constant 0 : index
    %c0_21 = arith.constant 0 : index
    %23 = vector.load %arg7[%c0_20, %c0_21] : memref<1x128xf32, #tpu.memory_space<vmem>>, vector<1x128xf32>
    tpu.vector_store %arg7[%c0_20, %c0_21], %22 {strides = array<i32>} : memref<1x128xf32, #tpu.memory_space<vmem>>, vector<1x128xf32>,
    return
  }
}

</mosaic_0001>

<llo_original>
// kernel: tpu_custom_call.1
$region0: #{tpu_custom_call.1}
  #allocation0 [shape = 'u32[]', space=smem, size = 0x4, offset = 0x4, fixed_abs, tag = 'smem constant byte address 0x4 - core index']
  #allocation1 [shape = 'u32[144,128]{1,0:T(1,128)}', space=vmem, size = 0x12000, scoped, tag = 'internal scratch']
  #allocation2 [shape = 'f32[1,1]{1,0:T(1,128)S(6)}', space=smem, size = 0x200, scoped, tag = 'scoped memory for tpu_custom_call.1']
  %s0 = inlined_call_operand.vmem [shape: bf16[128,128], index: 0, kind: input, shape index: {}]
  %s1 = inlined_call_operand.vmem [shape: bf16[128,16], index: 1, kind: input, shape index: {}]
  %s2 = inlined_call_operand.vmem [shape: f32[16,16], index: 2, kind: input, shape index: {}]
  %s3 = inlined_call_operand.vmem [shape: f32[1,16], index: 3, kind: input, shape index: {}]
  %s4 = inlined_call_operand.vmem [shape: f32[1,16], index: 4, kind: input, shape index: {}]
  %s5 = inlined_call_operand.vmem [shape: f32[1,16], index: 5, kind: input, shape index: {}]
  %s6 = inlined_call_operand.<no memory space> [shape: f32[1,1], index: 6, kind: input, shape index: {}]
  %s7 = inlined_call_operand.hbm [shape: f32[1,128], index: 7, kind: output, shape index: {}]
  %s8 = sld [smem:[#allocation0]]
  $region38: #{tpu_custom_call.1} parent=0
    _
  %s10 = ssub.s32 1, %s8
  %s11 = scalar_select 0, %s10, %s8
  %12 = sst [smem:[#allocation2]] %s6
  $region1: #{tpu_custom_call.1} parent=0
    #allocation3 [shape = 'u8[512]{0}', space=vmem, size = 0x400, scoped, tag = 'output window, operand 0, single buffered']
    #allocation4 [shape = 's32[1]{0}', space=sflag, size = 0x4, scoped, tag = 'scoped memory for tpu_custom_call.1']
    %13 = vsyncpa [#allocation4], 0
    // Predicated region
    $region2: #{tpu_custom_call.1} parent=1 // pred_check
      _
    $region3: #{tpu_custom_call.1} parent=1 // pred_check_branch
      %15 = sbr.rel (0) target = $region5
    $region4: #{tpu_custom_call.1} parent=1 // pred_region
      _
    $region5: #{tpu_custom_call.1} parent=1 // pred_fallthru
      _
    // Predicated region
    $region6: #{tpu_custom_call.1} parent=1 // pred_check
      _
    $region7: #{tpu_custom_call.1} parent=1 // pred_check_branch
      %17 = sbr.rel (0) target = $region9
    $region8: #{tpu_custom_call.1} parent=1 // pred_region
      _
    $region9: #{tpu_custom_call.1} parent=1 // pred_fallthru
      _
    // Predicated region
    $region10: #{tpu_custom_call.1} parent=1 // pred_check
      _
    $region11: #{tpu_custom_call.1} parent=1 // pred_check_branch
      %19 = sbr.rel (0) target = $region13
    $region12: #{tpu_custom_call.1} parent=1 // pred_region
      _
    $region13: #{tpu_custom_call.1} parent=1 // pred_fallthru
      _
    // Predicated region
    $region14: #{tpu_custom_call.1} parent=1 // pred_check
      _
    $region15: #{tpu_custom_call.1} parent=1 // pred_check_branch
      %21 = sbr.rel (0) target = $region17
    $region16: #{tpu_custom_call.1} parent=1 // pred_region
      _
    $region17: #{tpu_custom_call.1} parent=1 // pred_fallthru
      _
    // Predicated region
    $region18: #{tpu_custom_call.1} parent=1 // pred_check
      _
    $region19: #{tpu_custom_call.1} parent=1 // pred_check_branch
      %23 = sbr.rel (0) target = $region21
    $region20: #{tpu_custom_call.1} parent=1 // pred_region
      _
    $region21: #{tpu_custom_call.1} parent=1 // pred_fallthru
      _
    // Predicated region
    $region22: #{tpu_custom_call.1} parent=1 // pred_check
      _
    $region23: #{tpu_custom_call.1} parent=1 // pred_check_branch
      %25 = sbr.rel (0) target = $region25
    $region24: #{tpu_custom_call.1} parent=1 // pred_region
      _
    $region25: #{tpu_custom_call.1} parent=1 // pred_fallthru
      _
    // Predicated region
    $region26: #{tpu_custom_call.1} parent=1 // pred_check
      _
    $region27: #{tpu_custom_call.1} parent=1 // pred_check_branch
      %27 = sbr.rel (0) target = $region29
    $region28: #{tpu_custom_call.1} parent=1 // pred_region
      _
    $region29: #{tpu_custom_call.1} parent=1 // pred_fallthru
      _
    %v29 = vld [vmem:[%s0] sm:$0xf]
    %v30 = vld [vmem:[%s0 + $0x4] sm:$0xf]
    %v31 = vld [vmem:[%s0 + $0x8] sm:$0xf]
    %v32 = vld [vmem:[%s0 + $0xc] sm:$0xf]
    %v33 = vld [vmem:[%s0 + $0x10] sm:$0xf]
    %v34 = vld [vmem:[%s0 + $0x14] sm:$0xf]
    %v35 = vld [vmem:[%s0 + $0x18] sm:$0xf]
    %v36 = vld [vmem:[%s0 + $0x1c] sm:$0xf]
    %v37 = vld [vmem:[%s0 + $0x20] sm:$0xf]
    %v38 = vld [vmem:[%s0 + $0x24] sm:$0xf]
    %v39 = vld [vmem:[%s0 + $0x28] sm:$0xf]
    %v40 = vld [vmem:[%s0 + $0x2c] sm:$0xf]
    %v41 = vld [vmem:[%s0 + $0x30] sm:$0xf]
    %v42 = vld [vmem:[%s0 + $0x34] sm:$0xf]
    %v43 = vld [vmem:[%s0 + $0x38] sm:$0xf]
    %v44 = vld [vmem:[%s0 + $0x3c] sm:$0xf]
    %v45 = vld [vmem:[%s1] sm:$0xf]
    %v46 = vld [vmem:[%s1 + $0x4] sm:$0xf]
    %v47 = vld [vmem:[%s1 + $0x8] sm:$0xf]
    %v48 = vld [vmem:[%s1 + $0xc] sm:$0xf]
    %v49 = vld [vmem:[%s1 + $0x10] sm:$0xf]
    %v50 = vld [vmem:[%s1 + $0x14] sm:$0xf]
    %v51 = vld [vmem:[%s1 + $0x18] sm:$0xf]
    %v52 = vld [vmem:[%s1 + $0x1c] sm:$0xf]
    %v53 = vld [vmem:[%s1 + $0x20] sm:$0xf]
    %v54 = vld [vmem:[%s1 + $0x24] sm:$0xf]
    %v55 = vld [vmem:[%s1 + $0x28] sm:$0xf]
    %v56 = vld [vmem:[%s1 + $0x2c] sm:$0xf]
    %v57 = vld [vmem:[%s1 + $0x30] sm:$0xf]
    %v58 = vld [vmem:[%s1 + $0x34] sm:$0xf]
    %v59 = vld [vmem:[%s1 + $0x38] sm:$0xf]
    %v60 = vld [vmem:[%s1 + $0x3c] sm:$0xf]
    %v61 = vld [vmem:[%s3] sm:$0x1]
    %v63 = vlaneseq
    %v64 = vshrl.u32 %v63, 7
    %v65 = vsub.s32 0, %v64
    %v66 = vrot.slane %v61, %v65
    %v84 = vunpack.c.l.b16 %v29
    %v85 = vunpack.c.l.b16 %v30
    %v86 = vunpack.c.l.b16 %v31
    %v87 = vunpack.c.l.b16 %v32
    %v88 = vunpack.c.l.b16 %v33
    %v89 = vunpack.c.l.b16 %v34
    %v90 = vunpack.c.l.b16 %v35
    %v91 = vunpack.c.l.b16 %v36
    %v92 = vunpack.c.l.b16 %v37
    %v93 = vunpack.c.l.b16 %v38
    %v94 = vunpack.c.l.b16 %v39
    %v95 = vunpack.c.l.b16 %v40
    %v96 = vunpack.c.l.b16 %v41
    %v97 = vunpack.c.l.b16 %v42
    %v98 = vunpack.c.l.b16 %v43
    %v99 = vunpack.c.l.b16 %v44
    %v100 = vpack.c.b16 %v85, %v84
    %v101 = vpack.c.b16 %v87, %v86
    %v102 = vpack.c.b16 %v89, %v88
    %v103 = vpack.c.b16 %v91, %v90
    %v104 = vpack.c.b16 %v93, %v92
    %v105 = vpack.c.b16 %v95, %v94
    %v106 = vpack.c.b16 %v97, %v96
    %v107 = vpack.c.b16 %v99, %v98
    %v132 = vunpack.c.l.b16 %v45
    %v133 = vunpack.c.l.b16 %v46
    %v134 = vunpack.c.l.b16 %v47
    %v135 = vunpack.c.l.b16 %v48
    %v136 = vunpack.c.l.b16 %v49
    %v137 = vunpack.c.l.b16 %v50
    %v138 = vunpack.c.l.b16 %v51
    %v139 = vunpack.c.l.b16 %v52
    %v140 = vunpack.c.l.b16 %v53
    %v141 = vunpack.c.l.b16 %v54
    %v142 = vunpack.c.l.b16 %v55
    %v143 = vunpack.c.l.b16 %v56
    %v144 = vunpack.c.l.b16 %v57
    %v145 = vunpack.c.l.b16 %v58
    %v146 = vunpack.c.l.b16 %v59
    %v147 = vunpack.c.l.b16 %v60
    %v148 = vpack.c.b16 %v133, %v132
    %v149 = vpack.c.b16 %v135, %v134
    %v150 = vpack.c.b16 %v137, %v136
    %v151 = vpack.c.b16 %v139, %v138
    %v152 = vpack.c.b16 %v141, %v140
    %v153 = vpack.c.b16 %v143, %v142
    %v154 = vpack.c.b16 %v145, %v144
    %v155 = vpack.c.b16 %v147, %v146
    %164 = vmatprep.subr.bf16.mxu0 0
    %165 = vmatpush1.bf16.msra.mxu0 %v148
    %166 = vmatprep.subr.bf16.mxu0 0
    %167 = vmatpush1.bf16.msra.mxu0 %v149
    %168 = vmatprep.subr.bf16.mxu0 0
    %169 = vmatpush1.bf16.msra.mxu0 %v150
    %170 = vmatprep.subr.bf16.mxu0 0
    %171 = vmatpush1.bf16.msra.mxu0 %v151
    %172 = vmatprep.subr.bf16.mxu0 0
    %173 = vmatpush1.bf16.msra.mxu0 %v152
    %174 = vmatprep.subr.bf16.mxu0 0
    %175 = vmatpush1.bf16.msra.mxu0 %v153
    %176 = vmatprep.subr.bf16.mxu0 0
    %177 = vmatpush1.bf16.msra.mxu0 %v154
    %178 = vmatprep.subr.bf16.mxu0 0
    %179 = vmatpush1.bf16.msra.mxu0 %v155
    %180 = vmatprep.subr.bf16.mxu0 0
    %181 = vmatpush1.bf16.msra.mxu0 0
    %182 = vmatprep.subr.bf16.mxu0 0
    %183 = vmatpush1.bf16.msra.mxu0 0
    %184 = vmatprep.subr.bf16.mxu0 0
    %185 = vmatpush1.bf16.msra.mxu0 0
    %186 = vmatprep.subr.bf16.mxu0 0
    %187 = vmatpush1.bf16.msra.mxu0 0
    %188 = vmatprep.subr.bf16.mxu0 0
    %189 = vmatpush1.bf16.msra.mxu0 0
    %190 = vmatprep.subr.bf16.mxu0 0
    %191 = vmatpush1.bf16.msra.mxu0 0
    %192 = vmatprep.subr.bf16.mxu0 0
    %193 = vmatpush1.bf16.msra.mxu0 0
    %194 = vmatprep.subr.bf16.mxu0 0
    %195 = vmatpush1.bf16.msra.mxu0 0
    %196 = vmatprep.mubr.bf16.mxu0 0
    %197 = vmatmul.mubr.bf16.gmra.mrb[0].mxu0 %v100
    %v198 = vpop.f32.mrb[0].mxu0
    %v199 = vadd.f32 %v66, %v198
    %v200 = vpop.f32.mrb[0].mxu0
    %v201 = vpop.f32.mrb[0].mxu0
    %v202 = vadd.f32 %v66, %v201
    %v203 = vpop.f32.mrb[0].mxu0
    %204 = vmatprep.mubr.bf16.mxu0 0
    %205 = vmatmul.mubr.bf16.gmra.mrb[0].mxu0 %v101
    %v206 = vpop.f32.mrb[0].mxu0
    %v207 = vadd.f32 %v66, %v206
    %v208 = vpop.f32.mrb[0].mxu0
    %v209 = vpop.f32.mrb[0].mxu0
    %v210 = vadd.f32 %v66, %v209
    %v211 = vpop.f32.mrb[0].mxu0
    %212 = vmatprep.mubr.bf16.mxu0 0
    %213 = vmatmul.mubr.bf16.gmra.mrb[0].mxu0 %v102
    %v214 = vpop.f32.mrb[0].mxu0
    %v215 = vadd.f32 %v66, %v214
    %v216 = vpop.f32.mrb[0].mxu0
    %v217 = vpop.f32.mrb[0].mxu0
    %v218 = vadd.f32 %v66, %v217
    %v219 = vpop.f32.mrb[0].mxu0
    %220 = vmatprep.mubr.bf16.mxu0 0
    %221 = vmatmul.mubr.bf16.gmra.mrb[0].mxu0 %v103
    %v222 = vpop.f32.mrb[0].mxu0
    %v223 = vadd.f32 %v66, %v222
    %v224 = vpop.f32.mrb[0].mxu0
    %v225 = vpop.f32.mrb[0].mxu0
    %v226 = vadd.f32 %v66, %v225
    %v227 = vpop.f32.mrb[0].mxu0
    %228 = vmatprep.mubr.bf16.mxu0 0
    %229 = vmatmul.mubr.bf16.gmra.mrb[0].mxu0 %v104
    %v230 = vpop.f32.mrb[0].mxu0
    %v231 = vadd.f32 %v66, %v230
    %v232 = vpop.f32.mrb[0].mxu0
    %v233 = vpop.f32.mrb[0].mxu0
    %v234 = vadd.f32 %v66, %v233
    %v235 = vpop.f32.mrb[0].mxu0
    %236 = vmatprep.mubr.bf16.mxu0 0
    %237 = vmatmul.mubr.bf16.gmra.mrb[0].mxu0 %v105
    %v238 = vpop.f32.mrb[0].mxu0
    %v239 = vadd.f32 %v66, %v238
    %v240 = vpop.f32.mrb[0].mxu0
    %v241 = vpop.f32.mrb[0].mxu0
    %v242 = vadd.f32 %v66, %v241
    %v243 = vpop.f32.mrb[0].mxu0
    %244 = vmatprep.mubr.bf16.mxu0 0
    %245 = vmatmul.mubr.bf16.gmra.mrb[0].mxu0 %v106
    %v246 = vpop.f32.mrb[0].mxu0
    %v247 = vadd.f32 %v66, %v246
    %v248 = vpop.f32.mrb[0].mxu0
    %v249 = vpop.f32.mrb[0].mxu0
    %v250 = vadd.f32 %v66, %v249
    %v251 = vpop.f32.mrb[0].mxu0
    %252 = vmatprep.mubr.bf16.mxu0 0
    %253 = vmatmul.mubr.bf16.gmra.mrb[0].mxu0 %v107
    %v254 = vpop.f32.mrb[0].mxu0
    %v255 = vadd.f32 %v66, %v254
    %v256 = vpop.f32.mrb[0].mxu0
    %v257 = vpop.f32.mrb[0].mxu0
    %v258 = vadd.f32 %v66, %v257
    %v259 = vpop.f32.mrb[0].mxu0
    %260 = vdwg.mxu0
    %v261 = vmax.f32 %v199, 0.0
    %v262 = vmax.f32 %v202, 0.0
    %v263 = vmax.f32 %v207, 0.0
    %v264 = vmax.f32 %v210, 0.0
    %v265 = vmax.f32 %v215, 0.0
    %v266 = vmax.f32 %v218, 0.0
    %v267 = vmax.f32 %v223, 0.0
    %v268 = vmax.f32 %v226, 0.0
    %v269 = vmax.f32 %v231, 0.0
    %v270 = vmax.f32 %v234, 0.0
    %v271 = vmax.f32 %v239, 0.0
    %v272 = vmax.f32 %v242, 0.0
    %v273 = vmax.f32 %v247, 0.0
    %v274 = vmax.f32 %v250, 0.0
    %v275 = vmax.f32 %v255, 0.0
    %v276 = vmax.f32 %v258, 0.0
    %v277 = vpack.c.bf16 %v262, %v261
    %v278 = vpack.c.bf16 %v264, %v263
    %v279 = vpack.c.bf16 %v266, %v265
    %v280 = vpack.c.bf16 %v268, %v267
    %v281 = vpack.c.bf16 %v270, %v269
    %v282 = vpack.c.bf16 %v272, %v271
    %v283 = vpack.c.bf16 %v274, %v273
    %v284 = vpack.c.bf16 %v276, %v275
    %285 = vmatprep.subr.bf16.mxu0 0
    %286 = vmatpush1.bf16.msra.mxu0 %v277
    %287 = vmatprep.subr.bf16.mxu0 0
    %288 = vmatpush1.bf16.msra.mxu0 %v278
    %289 = vmatprep.subr.bf16.mxu0 0
    %290 = vmatpush1.bf16.msra.mxu0 %v279
    %291 = vmatprep.subr.bf16.mxu0 0
    %292 = vmatpush1.bf16.msra.mxu0 %v280
    %293 = vmatprep.subr.bf16.mxu0 0
    %294 = vmatpush1.bf16.msra.mxu0 %v281
    %295 = vmatprep.subr.bf16.mxu0 0
    %296 = vmatpush1.bf16.msra.mxu0 %v282
    %297 = vmatprep.subr.bf16.mxu0 0
    %298 = vmatpush1.bf16.msra.mxu0 %v283
    %299 = vmatprep.subr.bf16.mxu0 0
    %300 = vmatpush1.bf16.msra.mxu0 %v284
    %301 = vmatprep.subr.bf16.mxu0 0
    %302 = vmatpush1.bf16.msra.mxu0 0
    %303 = vmatprep.subr.bf16.mxu0 0
    %304 = vmatpush1.bf16.msra.mxu0 0
    %305 = vmatprep.subr.bf16.mxu0 0
    %306 = vmatpush1.bf16.msra.mxu0 0
    %307 = vmatprep.subr.bf16.mxu0 0
    %308 = vmatpush1.bf16.msra.mxu0 0
    %309 = vmatprep.subr.bf16.mxu0 0
    %310 = vmatpush1.bf16.msra.mxu0 0
    %311 = vmatprep.subr.bf16.mxu0 0
    %312 = vmatpush1.bf16.msra.mxu0 0
    %313 = vmatprep.subr.bf16.mxu0 0
    %314 = vmatpush1.bf16.msra.mxu0 0
    %315 = vmatprep.subr.bf16.mxu0 0
    %316 = vmatpush1.bf16.msra.mxu0 0
    %317 = vmatprep.mubr.bf16.mxu0 0
    %318 = vmatmul.mubr.bf16.gmra.mrb[0].mxu0 %v100
    %v319 = vpop.f32.mrb[0].mxu0
    %v320 = vadd.f32 0.0, %v319
    %v321 = vpop.f32.mrb[0].mxu0
    %v322 = vpop.f32.mrb[0].mxu0
    %v323 = vadd.f32 0.0, %v322
    %v324 = vpop.f32.mrb[0].mxu0
    %325 = vmatprep.mubr.bf16.mxu0 0
    %326 = vmatmul.mubr.bf16.gmra.mrb[0].mxu0 %v101
    %v327 = vpop.f32.mrb[0].mxu0
    %v328 = vadd.f32 0.0, %v327
    %v329 = vpop.f32.mrb[0].mxu0
    %v330 = vpop.f32.mrb[0].mxu0
    %v331 = vadd.f32 0.0, %v330
    %v332 = vpop.f32.mrb[0].mxu0
    %333 = vmatprep.mubr.bf16.mxu0 0
    %334 = vmatmul.mubr.bf16.gmra.mrb[0].mxu0 %v102
    %v335 = vpop.f32.mrb[0].mxu0
    %v336 = vadd.f32 0.0, %v335
    %v337 = vpop.f32.mrb[0].mxu0
    %v338 = vpop.f32.mrb[0].mxu0
    %v339 = vadd.f32 0.0, %v338
    %v340 = vpop.f32.mrb[0].mxu0
    %341 = vmatprep.mubr.bf16.mxu0 0
    %342 = vmatmul.mubr.bf16.gmra.mrb[0].mxu0 %v103
    %v343 = vpop.f32.mrb[0].mxu0
    %v344 = vadd.f32 0.0, %v343
    %v345 = vpop.f32.mrb[0].mxu0
    %v346 = vpop.f32.mrb[0].mxu0
    %v347 = vadd.f32 0.0, %v346
    %v348 = vpop.f32.mrb[0].mxu0
    %349 = vmatprep.mubr.bf16.mxu0 0
    %350 = vmatmul.mubr.bf16.gmra.mrb[0].mxu0 %v104
    %v351 = vpop.f32.mrb[0].mxu0
    %v352 = vadd.f32 0.0, %v351
    %v353 = vpop.f32.mrb[0].mxu0
    %v354 = vpop.f32.mrb[0].mxu0
    %v355 = vadd.f32 0.0, %v354
    %v356 = vpop.f32.mrb[0].mxu0
    %357 = vmatprep.mubr.bf16.mxu0 0
    %358 = vmatmul.mubr.bf16.gmra.mrb[0].mxu0 %v105
    %v359 = vpop.f32.mrb[0].mxu0
    %v360 = vadd.f32 0.0, %v359
    %v361 = vpop.f32.mrb[0].mxu0
    %v362 = vpop.f32.mrb[0].mxu0
    %v363 = vadd.f32 0.0, %v362
    %v364 = vpop.f32.mrb[0].mxu0
    %365 = vmatprep.mubr.bf16.mxu0 0
    %366 = vmatmul.mubr.bf16.gmra.mrb[0].mxu0 %v106
    %v367 = vpop.f32.mrb[0].mxu0
    %v368 = vadd.f32 0.0, %v367
    %v369 = vpop.f32.mrb[0].mxu0
    %v370 = vpop.f32.mrb[0].mxu0
    %v371 = vadd.f32 0.0, %v370
    %v372 = vpop.f32.mrb[0].mxu0
    %373 = vmatprep.mubr.bf16.mxu0 0
    %374 = vmatmul.mubr.bf16.gmra.mrb[0].mxu0 %v107
    %v375 = vpop.f32.mrb[0].mxu0
    %v376 = vadd.f32 0.0, %v375
    %v377 = vpop.f32.mrb[0].mxu0
    %v378 = vpop.f32.mrb[0].mxu0
    %v379 = vadd.f32 0.0, %v378
    %v380 = vpop.f32.mrb[0].mxu0
    %381 = vdwg.mxu0
    %v382 = vld [vmem:[%s2] sm:$0xff]
    %v383 = vld [vmem:[%s2 + $0x8] sm:$0xff]
    %v384 = vld [vmem:[%s4] sm:$0x1]
    %v386 = vlaneseq
    %v387 = vshrl.u32 %v386, 7
    %v388 = vsub.s32 0, %v387
    %v389 = vrot.slane %v384, %v388
    %vm391 = vcmask 130048
    %v393 = vsel %vm391, %v320, 0
    %v396 = vsel %vm391, %v323, 0
    %v399 = vsel %vm391, %v328, 0
    %v402 = vsel %vm391, %v331, 0
    %v405 = vsel %vm391, %v336, 0
    %v408 = vsel %vm391, %v339, 0
    %v411 = vsel %vm391, %v344, 0
    %v414 = vsel %vm391, %v347, 0
    %v417 = vsel %vm391, %v352, 0
    %v420 = vsel %vm391, %v355, 0
    %v423 = vsel %vm391, %v360, 0
    %v426 = vsel %vm391, %v363, 0
    %v429 = vsel %vm391, %v368, 0
    %v432 = vsel %vm391, %v371, 0
    %v435 = vsel %vm391, %v376, 0
    %v438 = vsel %vm391, %v379, 0
    %440 = vmatprep.subr.mxu0 0.0
    %441 = vmatpush1.msra.mxu0 %v382
    %442 = vmatprep.subr.mxu0 0.0
    %443 = vmatpush1.msra.mxu0 %v383
    %444 = vmatprep.subr.mxu0 0.0
    %445 = vmatpush1.msra.mxu0 0.0
    %446 = vmatprep.subr.mxu0 0.0
    %447 = vmatpush1.msra.mxu0 0.0
    %448 = vmatprep.subr.mxu0 0.0
    %449 = vmatpush1.msra.mxu0 0.0
    %450 = vmatprep.subr.mxu0 0.0
    %451 = vmatpush1.msra.mxu0 0.0
    %452 = vmatprep.subr.mxu0 0.0
    %453 = vmatpush1.msra.mxu0 0.0
    %454 = vmatprep.subr.mxu0 0.0
    %455 = vmatpush1.msra.mxu0 0.0
    %456 = vmatprep.subr.mxu0 0.0
    %457 = vmatpush1.msra.mxu0 0.0
    %458 = vmatprep.subr.mxu0 0.0
    %459 = vmatpush1.msra.mxu0 0.0
    %460 = vmatprep.subr.mxu0 0.0
    %461 = vmatpush1.msra.mxu0 0.0
    %462 = vmatprep.subr.mxu0 0.0
    %463 = vmatpush1.msra.mxu0 0.0
    %464 = vmatprep.subr.mxu0 0.0
    %465 = vmatpush1.msra.mxu0 0.0
    %466 = vmatprep.subr.mxu0 0.0
    %467 = vmatpush1.msra.mxu0 0.0
    %468 = vmatprep.subr.mxu0 0.0
    %469 = vmatpush1.msra.mxu0 0.0
    %470 = vmatprep.subr.mxu0 0.0
    %471 = vmatpush1.msra.mxu0 0.0
    %472 = vmatprep.subr.mxu0 0.0
    %473 = vmatpush1.msra.mxu0 0.0
    %474 = vmatprep.subr.mxu0 0.0
    %475 = vmatpush1.msra.mxu0 0.0
    %476 = vmatprep.subr.mxu0 0.0
    %477 = vmatpush1.msra.mxu0 0.0
    %478 = vmatprep.subr.mxu0 0.0
    %479 = vmatpush1.msra.mxu0 0.0
    %480 = vmatprep.subr.mxu0 0.0
    %481 = vmatpush1.msra.mxu0 0.0
    %482 = vmatprep.subr.mxu0 0.0
    %483 = vmatpush1.msra.mxu0 0.0
    %484 = vmatprep.subr.mxu0 0.0
    %485 = vmatpush1.msra.mxu0 0.0
    %486 = vmatprep.subr.mxu0 0.0
    %487 = vmatpush1.msra.mxu0 0.0
    %488 = vmatprep.subr.mxu0 0.0
    %489 = vmatpush1.msra.mxu0 0.0
    %490 = vmatprep.subr.mxu0 0.0
    %491 = vmatpush1.msra.mxu0 0.0
    %492 = vmatprep.subr.mxu0 0.0
    %493 = vmatpush1.msra.mxu0 0.0
    %494 = vmatprep.subr.mxu0 0.0
    %495 = vmatpush1.msra.mxu0 0.0
    %496 = vmatprep.subr.mxu0 0.0
    %497 = vmatpush1.msra.mxu0 0.0
    %498 = vmatprep.subr.mxu0 0.0
    %499 = vmatpush1.msra.mxu0 0.0
    %500 = vmatprep.subr.mxu0 0.0
    %501 = vmatpush1.msra.mxu0 0.0
    %502 = vmatprep.subr.mxu0 0.0
    %503 = vmatpush1.msra.mxu0 0.0
    %504 = vmatprep.mubr.f32.mxu0 0.0
    %505 = vmatmul.mubr.f32.gmra.mrb[0].mxu0 %v393
    %v506 = vpop.f32.mrb[0].mxu0
    %v507 = vadd.f32 %v389, %v506
    %v508 = vpop.f32.mrb[0].mxu0
    %509 = vmatprep.mubr.f32.mxu0 0.0
    %510 = vmatmul.mubr.f32.gmra.mrb[0].mxu0 %v396
    %v511 = vpop.f32.mrb[0].mxu0
    %v512 = vadd.f32 %v389, %v511
    %v513 = vpop.f32.mrb[0].mxu0
    %514 = vmatprep.mubr.f32.mxu0 0.0
    %515 = vmatmul.mubr.f32.gmra.mrb[0].mxu0 %v399
    %v516 = vpop.f32.mrb[0].mxu0
    %v517 = vadd.f32 %v389, %v516
    %v518 = vpop.f32.mrb[0].mxu0
    %519 = vmatprep.mubr.f32.mxu0 0.0
    %520 = vmatmul.mubr.f32.gmra.mrb[0].mxu0 %v402
    %v521 = vpop.f32.mrb[0].mxu0
    %v522 = vadd.f32 %v389, %v521
    %v523 = vpop.f32.mrb[0].mxu0
    %524 = vmatprep.mubr.f32.mxu0 0.0
    %525 = vmatmul.mubr.f32.gmra.mrb[0].mxu0 %v405
    %v526 = vpop.f32.mrb[0].mxu0
    %v527 = vadd.f32 %v389, %v526
    %v528 = vpop.f32.mrb[0].mxu0
    %529 = vmatprep.mubr.f32.mxu0 0.0
    %530 = vmatmul.mubr.f32.gmra.mrb[0].mxu0 %v408
    %v531 = vpop.f32.mrb[0].mxu0
    %v532 = vadd.f32 %v389, %v531
    %v533 = vpop.f32.mrb[0].mxu0
    %534 = vmatprep.mubr.f32.mxu0 0.0
    %535 = vmatmul.mubr.f32.gmra.mrb[0].mxu0 %v411
    %v536 = vpop.f32.mrb[0].mxu0
    %v537 = vadd.f32 %v389, %v536
    %v538 = vpop.f32.mrb[0].mxu0
    %539 = vmatprep.mubr.f32.mxu0 0.0
    %540 = vmatmul.mubr.f32.gmra.mrb[0].mxu0 %v414
    %v541 = vpop.f32.mrb[0].mxu0
    %v542 = vadd.f32 %v389, %v541
    %v543 = vpop.f32.mrb[0].mxu0
    %544 = vmatprep.mubr.f32.mxu0 0.0
    %545 = vmatmul.mubr.f32.gmra.mrb[0].mxu0 %v417
    %v546 = vpop.f32.mrb[0].mxu0
    %v547 = vadd.f32 %v389, %v546
    %v548 = vpop.f32.mrb[0].mxu0
    %549 = vmatprep.mubr.f32.mxu0 0.0
    %550 = vmatmul.mubr.f32.gmra.mrb[0].mxu0 %v420
    %v551 = vpop.f32.mrb[0].mxu0
    %v552 = vadd.f32 %v389, %v551
    %v553 = vpop.f32.mrb[0].mxu0
    %554 = vmatprep.mubr.f32.mxu0 0.0
    %555 = vmatmul.mubr.f32.gmra.mrb[0].mxu0 %v423
    %v556 = vpop.f32.mrb[0].mxu0
    %v557 = vadd.f32 %v389, %v556
    %v558 = vpop.f32.mrb[0].mxu0
    %559 = vmatprep.mubr.f32.mxu0 0.0
    %560 = vmatmul.mubr.f32.gmra.mrb[0].mxu0 %v426
    %v561 = vpop.f32.mrb[0].mxu0
    %v562 = vadd.f32 %v389, %v561
    %v563 = vpop.f32.mrb[0].mxu0
    %564 = vmatprep.mubr.f32.mxu0 0.0
    %565 = vmatmul.mubr.f32.gmra.mrb[0].mxu0 %v429
    %v566 = vpop.f32.mrb[0].mxu0
    %v567 = vadd.f32 %v389, %v566
    %v568 = vpop.f32.mrb[0].mxu0
    %569 = vmatprep.mubr.f32.mxu0 0.0
    %570 = vmatmul.mubr.f32.gmra.mrb[0].mxu0 %v432
    %v571 = vpop.f32.mrb[0].mxu0
    %v572 = vadd.f32 %v389, %v571
    %v573 = vpop.f32.mrb[0].mxu0
    %574 = vmatprep.mubr.f32.mxu0 0.0
    %575 = vmatmul.mubr.f32.gmra.mrb[0].mxu0 %v435
    %v576 = vpop.f32.mrb[0].mxu0
    %v577 = vadd.f32 %v389, %v576
    %v578 = vpop.f32.mrb[0].mxu0
    %579 = vmatprep.mubr.f32.mxu0 0.0
    %580 = vmatmul.mubr.f32.gmra.mrb[0].mxu0 %v438
    %v581 = vpop.f32.mrb[0].mxu0
    %v582 = vadd.f32 %v389, %v581
    %v583 = vpop.f32.mrb[0].mxu0
    %584 = vdwg.mxu0
    %v585 = vmax.f32 %v507, 0.0
    %v586 = vmax.f32 %v512, 0.0
    %v587 = vmax.f32 %v517, 0.0
    %v588 = vmax.f32 %v522, 0.0
    %v589 = vmax.f32 %v527, 0.0
    %v590 = vmax.f32 %v532, 0.0
    %v591 = vmax.f32 %v537, 0.0
    %v592 = vmax.f32 %v542, 0.0
    %v593 = vmax.f32 %v547, 0.0
    %v594 = vmax.f32 %v552, 0.0
    %v595 = vmax.f32 %v557, 0.0
    %v596 = vmax.f32 %v562, 0.0
    %v597 = vmax.f32 %v567, 0.0
    %v598 = vmax.f32 %v572, 0.0
    %v599 = vmax.f32 %v577, 0.0
    %v600 = vmax.f32 %v582, 0.0
    %v601 = vld [vmem:[%s5] sm:$0x1]
    %s602 = sld [smem:[#allocation2]]
    %v603 = vstv %s602
    %v605 = vsel %vm391, %v601, 0
    %v608 = vsel %vm391, %v585, 0
    %v611 = vsel %vm391, %v586, 0
    %v614 = vsel %vm391, %v587, 0
    %v617 = vsel %vm391, %v588, 0
    %v620 = vsel %vm391, %v589, 0
    %v623 = vsel %vm391, %v590, 0
    %v626 = vsel %vm391, %v591, 0
    %v629 = vsel %vm391, %v592, 0
    %v632 = vsel %vm391, %v593, 0
    %v635 = vsel %vm391, %v594, 0
    %v638 = vsel %vm391, %v595, 0
    %v641 = vsel %vm391, %v596, 0
    %v644 = vsel %vm391, %v597, 0
    %v647 = vsel %vm391, %v598, 0
    %v650 = vsel %vm391, %v599, 0
    %v653 = vsel %vm391, %v600, 0
    %655 = vmatprep.subr.mxu0 0.0
    %656 = vmatpush1.xpose.msra.mxu0 %v608
    %657 = vmatprep.subr.mxu0 0.0
    %658 = vmatpush1.xpose.msra.mxu0 %v611
    %659 = vmatprep.subr.mxu0 0.0
    %660 = vmatpush1.xpose.msra.mxu0 %v614
    %661 = vmatprep.subr.mxu0 0.0
    %662 = vmatpush1.xpose.msra.mxu0 %v617
    %663 = vmatprep.subr.mxu0 0.0
    %664 = vmatpush1.xpose.msra.mxu0 %v620
    %665 = vmatprep.subr.mxu0 0.0
    %666 = vmatpush1.xpose.msra.mxu0 %v623
    %667 = vmatprep.subr.mxu0 0.0
    %668 = vmatpush1.xpose.msra.mxu0 %v626
    %669 = vmatprep.subr.mxu0 0.0
    %670 = vmatpush1.xpose.msra.mxu0 %v629
    %671 = vmatprep.subr.mxu0 0.0
    %672 = vmatpush1.xpose.msra.mxu0 %v632
    %673 = vmatprep.subr.mxu0 0.0
    %674 = vmatpush1.xpose.msra.mxu0 %v635
    %675 = vmatprep.subr.mxu0 0.0
    %676 = vmatpush1.xpose.msra.mxu0 %v638
    %677 = vmatprep.subr.mxu0 0.0
    %678 = vmatpush1.xpose.msra.mxu0 %v641
    %679 = vmatprep.subr.mxu0 0.0
    %680 = vmatpush1.xpose.msra.mxu0 %v644
    %681 = vmatprep.subr.mxu0 0.0
    %682 = vmatpush1.xpose.msra.mxu0 %v647
    %683 = vmatprep.subr.mxu0 0.0
    %684 = vmatpush1.xpose.msra.mxu0 %v650
    %685 = vmatprep.subr.mxu0 0.0
    %686 = vmatpush1.xpose.msra.mxu0 %v653
    %687 = vmatprep.subr.mxu0 0.0
    %688 = vmatpush1.xpose.msra.mxu0 0.0
    %689 = vmatprep.subr.mxu0 0.0
    %690 = vmatpush1.xpose.msra.mxu0 0.0
    %691 = vmatprep.subr.mxu0 0.0
    %692 = vmatpush1.xpose.msra.mxu0 0.0
    %693 = vmatprep.subr.mxu0 0.0
    %694 = vmatpush1.xpose.msra.mxu0 0.0
    %695 = vmatprep.subr.mxu0 0.0
    %696 = vmatpush1.xpose.msra.mxu0 0.0
    %697 = vmatprep.subr.mxu0 0.0
    %698 = vmatpush1.xpose.msra.mxu0 0.0
    %699 = vmatprep.subr.mxu0 0.0
    %700 = vmatpush1.xpose.msra.mxu0 0.0
    %701 = vmatprep.subr.mxu0 0.0
    %702 = vmatpush1.xpose.msra.mxu0 0.0
    %703 = vmatprep.subr.mxu0 0.0
    %704 = vmatpush1.xpose.msra.mxu0 0.0
    %705 = vmatprep.subr.mxu0 0.0
    %706 = vmatpush1.xpose.msra.mxu0 0.0
    %707 = vmatprep.subr.mxu0 0.0
    %708 = vmatpush1.xpose.msra.mxu0 0.0
    %709 = vmatprep.subr.mxu0 0.0
    %710 = vmatpush1.xpose.msra.mxu0 0.0
    %711 = vmatprep.subr.mxu0 0.0
    %712 = vmatpush1.xpose.msra.mxu0 0.0
    %713 = vmatprep.subr.mxu0 0.0
    %714 = vmatpush1.xpose.msra.mxu0 0.0
    %715 = vmatprep.subr.mxu0 0.0
    %716 = vmatpush1.xpose.msra.mxu0 0.0
    %717 = vmatprep.subr.mxu0 0.0
    %718 = vmatpush1.xpose.msra.mxu0 0.0
    %719 = vmatprep.mubr.f32.mxu0 0.0
    %720 = vmatmul.mubr.f32.gmra.mrb[0].mxu0 %v605
    %v721 = vpop.f32.mrb[0].mxu0
    %v722 = vadd.f32 %v603, %v721
    %v723 = vpop.f32.mrb[0].mxu0
    %724 = vdwg.mxu0
    %725 = vst [vmem:[#allocation3] sm:$0x1] %v722
    // Predicated region
    $region30: #{tpu_custom_call.1} parent=1 // pred_check
      _
    $region31: #{tpu_custom_call.1} parent=1 // pred_check_branch
      %727 = sbr.rel (0) target = $region33
    $region32: #{tpu_custom_call.1} parent=1 // pred_region
      %s729 = ssub.s32 16, 16
      %730 = vsyncadd [#allocation4], %s729
      %s732 = sshll.u32 [#allocation3], 4
      %s733 = int_to_ptr.vmem [resolvable:$true] %s732
      %735 = dma.vmem_to_hbm [thread:$0]  %s733, 16, %s7, [#allocation4]
    $region33: #{tpu_custom_call.1} parent=1 // pred_fallthru
      _
    // Predicated region
    $region34: #{tpu_custom_call.1} parent=1 // pred_check
      _
    $region35: #{tpu_custom_call.1} parent=1 // pred_check_branch
      %737 = sbr.rel (0) target = $region37
    $region36: #{tpu_custom_call.1} parent=1 // pred_region
      %738 = dma.done [#allocation4], 16
    $region37: #{tpu_custom_call.1} parent=1 // pred_fallthru
      _
    %739 = vsyncpa [#allocation4], 1

</llo_original>
